<compile_context>
chip_gen: v7x
topology: tpu7x:2x2x1
jax: 0.10.0
libtpu: 0.0.40
codegen_flags: <defaults>
</compile_context>

<pallas_src>
import jax
import jax.numpy as jnp
from jax.experimental import pallas as pl
from jax.experimental.pallas import tpu as pltpu


def _round_up(x, m):
    return (x + m - 1) // m * m


# lhs contracted on dim 1 (standard), rhs contracted on dim 1 (transposed rhs,
# same dimension numbers as the q @ k^T flash-attention pattern).
_NT_DIMS = (((1,), (1,)), ((), ()))


def _seqmodel_kernel(emb_ref, w1_ref, b1_ref, w2_ref, b2_ref,
                     label_ref, mask_ref, loss_ref, seq_ref):
    # emb_ref:  [TN, D] bf16  (tokens on sublanes, exactly as gathered in HBM)
    # w1_ref:   [Hp, D] bf16,  b1_ref: [Hp, 1] f32
    # w2_ref:   [Lp, Hp] f32,  b2_ref: [Lp, 1] f32 (pad rows = -1e30 -> class mask baked in)
    # label_ref/mask_ref: [1, TN] i32
    # loss_ref: [1, TN] f32 (per-token NLL, 0 where label==0 / padding)
    # seq_ref:  [1, TN] i32 (masked argmax tag)

    # h_t[Hp, TN] = w1[Hp, D] @ emb[TN, D]^T   (NT dot on MXU; no HBM transpose pass)
    h_t = jnp.tanh(
        jax.lax.dot_general(w1_ref[...], emb_ref[...], _NT_DIMS,
                            preferred_element_type=jnp.float32)
        + b1_ref[...]
    )                                                               # [Hp, TN] f32
    logits = (
        jnp.dot(w2_ref[...], h_t, preferred_element_type=jnp.float32)
        + b2_ref[...]
    )                                                               # [Lp, TN] f32
    # padded classes already carry logit == -1e30 via the b2 padding.

    lp, tn = logits.shape
    cls = jax.lax.broadcasted_iota(jnp.int32, (lp, tn), 0)          # class ids (sublanes)

    labels = label_ref[...]                                         # [1, TN] i32
    maskv = mask_ref[...]                                           # [1, TN] i32

    # --- F.cross_entropy(..., ignore_index=0, size_average=False): per-token NLL
    mx = jnp.max(logits, axis=0, keepdims=True)                     # [1, TN]
    lse = mx + jnp.log(jnp.sum(jnp.exp(logits - mx), axis=0, keepdims=True))
    gold = jnp.sum(jnp.where(cls == labels, logits, 0.0), axis=0, keepdims=True)
    valid = (labels != 0).astype(jnp.float32)
    loss_ref[...] = valid * (lse - gold)

    # --- _, seq = torch.max(out, 2); seq = mask.long() * seq   (first max index)
    is_max = logits == mx
    cand = jnp.where(is_max, cls.astype(jnp.float32), jnp.float32(lp))
    first_max = jnp.min(cand, axis=0, keepdims=True).astype(jnp.int32)
    seq_ref[...] = maskv * first_max


def init_params(key, vocab_size, embed_dim, hidden_dim, label_alphabet_size):
    k0, k1, k2, k3, k4 = jax.random.split(key, 5)
    scale = 0.1
    return {
        "emb": scale * jax.random.normal(k0, (vocab_size, embed_dim), jnp.float32),
        "w1": scale * jax.random.normal(k1, (embed_dim, hidden_dim), jnp.float32),
        "b1": scale * jax.random.normal(k2, (1, hidden_dim), jnp.float32),
        "w2": scale * jax.random.normal(k3, (hidden_dim, label_alphabet_size), jnp.float32),
        "b2": scale * jax.random.normal(k4, (1, label_alphabet_size), jnp.float32),
    }


def _pick_token_tile(n):
    """Token tile: large to amortize per-step overhead; >= 2 grid steps when possible."""
    n128 = _round_up(max(n, 1), 128)
    tn = min(2048, n128)
    if n128 >= 256:                       # keep >= 2 tiles so both v7x TCs get work
        tn = min(tn, max(128, (n128 // 2) // 128 * 128))
    return tn


def seqmodel_forward(params, batch_word, batch_word_len, batch_char,
                     batch_char_len, char_recover, batch_label, mask,
                     *, average_loss=False, batch_size=1):
    # TODO(synk): WordSequence's char-CNN + BiLSTM source is not provided; it is
    # approximated as embedding lookup + tanh MLP -> hidden2tag logits.
    # TODO(synk): CRF branch (use_crf=True) not implemented; this is the
    # use_crf=False cross-entropy + masked-argmax branch of SeqModel.forward.
    del batch_word_len, batch_char, batch_char_len, char_recover  # unused in this branch

    B, S = batch_word.shape
    N = B * S
    D, H = params["w1"].shape
    L = params["w2"].shape[1]

    Hp = _round_up(H, 8)
    Lp = _round_up(L, 8)
    TN = _pick_token_tile(N)
    N_pad = _round_up(N, TN)
    num_tiles = N_pad // TN

    # --- plain-JAX glue: single gather pass, written once in bf16, no transpose ---
    ids = jnp.pad(batch_word.reshape(-1).astype(jnp.int32), (0, N_pad - N))
    emb_g = params["emb"][ids].astype(jnp.bfloat16)                  # [N_pad, D] bf16

    labels = jnp.pad(batch_label.reshape(-1).astype(jnp.int32),
                     (0, N_pad - N)).reshape(1, N_pad)               # pad rows -> label 0 (ignored)
    maskv = jnp.pad(mask.reshape(-1).astype(jnp.int32),
                    (0, N_pad - N)).reshape(1, N_pad)                # pad rows -> mask 0

    # pad H -> Hp (zeros: padded hidden units contribute 0) and L -> Lp with the
    # class mask baked in: padded w2 rows = 0, padded b2 rows = -1e30.
    w1t = jnp.pad(params["w1"].T, ((0, Hp - H), (0, 0))).astype(jnp.bfloat16)   # [Hp, D]
    b1t = jnp.pad(params["b1"].T, ((0, Hp - H), (0, 0)))                        # [Hp, 1]
    w2t = jnp.pad(params["w2"].T, ((0, Lp - L), (0, Hp - H)))                   # [Lp, Hp]
    b2t = jnp.pad(params["b2"].T, ((0, Lp - L), (0, 0)),
                  constant_values=-1e30)                                        # [Lp, 1]

    loss_tok, seq = pl.pallas_call(
        _seqmodel_kernel,
        grid=(num_tiles,),
        in_specs=[
            pl.BlockSpec((TN, D), lambda i: (i, 0)),     # emb (streamed bf16, double-buffered)
            pl.BlockSpec((Hp, D), lambda i: (0, 0)),     # w1t   (resident)
            pl.BlockSpec((Hp, 1), lambda i: (0, 0)),     # b1t
            pl.BlockSpec((Lp, Hp), lambda i: (0, 0)),    # w2t
            pl.BlockSpec((Lp, 1), lambda i: (0, 0)),     # b2t (-1e30 pad rows)
            pl.BlockSpec((1, TN), lambda i: (0, i)),     # labels (lane-dense)
            pl.BlockSpec((1, TN), lambda i: (0, i)),     # mask   (lane-dense)
        ],
        out_specs=(
            pl.BlockSpec((1, TN), lambda i: (0, i)),     # per-token loss (lane-dense)
            pl.BlockSpec((1, TN), lambda i: (0, i)),     # seq            (lane-dense)
        ),
        out_shape=(jax.ShapeDtypeStruct((1, N_pad), jnp.float32),
                   jax.ShapeDtypeStruct((1, N_pad), jnp.int32)),
        compiler_params=pltpu.CompilerParams(
            dimension_semantics=("parallel",)),          # dual-TC sharding on v7x
    )(emb_g, w1t, b1t, w2t, b2t, labels, maskv)

    loss = jnp.sum(loss_tok)                             # padded/ignored tokens contribute 0
    if average_loss:
        loss = loss / batch_size
    seq = seq[0, :N].reshape(B, S)
    return loss, seq


if __name__ == "__main__":
    key = jax.random.PRNGKey(0)
    B, S = 2, 8
    vocab_size, embed_dim, hidden_dim = 50, 32, 32
    target_size = 7
    label_alphabet_size = target_size + 2   # SeqModel.__init__: label_alphabet_size += 2

    pkey, wkey, lkey = jax.random.split(key, 3)
    params = init_params(pkey, vocab_size, embed_dim, hidden_dim, label_alphabet_size)

    batch_word = jax.random.randint(wkey, (B, S), 1, vocab_size, dtype=jnp.int32)
    batch_word_len = jnp.array([S, S - 2], dtype=jnp.int32)
    mask = (jnp.arange(S)[None, :] < batch_word_len[:, None]).astype(jnp.int32)
    batch_label = jax.random.randint(lkey, (B, S), 1, label_alphabet_size,
                                     dtype=jnp.int32) * mask   # padded positions -> 0 (ignored)
    # char-level inputs exist in the signature but are unused in this branch.
    batch_char = jnp.zeros((B * S, 4), dtype=jnp.int32)
    batch_char_len = jnp.ones((B * S,), dtype=jnp.int32)
    char_recover = jnp.arange(B * S, dtype=jnp.int32)

    loss, seq = seqmodel_forward(
        params, batch_word, batch_word_len, batch_char, batch_char_len,
        char_recover, batch_label, mask, average_loss=True, batch_size=B)
    jax.block_until_ready((loss, seq))

    # pure-JAX reference with the same bf16 quantization of the streamed operands
    emb_q = params["emb"].astype(jnp.bfloat16).astype(jnp.float32)
    w1_q = params["w1"].astype(jnp.bfloat16).astype(jnp.float32)
    emb = emb_q[batch_word.reshape(-1)]
    h = jnp.tanh(emb @ w1_q + params["b1"])
    logits = h @ params["w2"] + params["b2"]
    lse = jax.nn.logsumexp(logits, axis=-1)
    gold = jnp.take_along_axis(logits, batch_label.reshape(-1, 1), axis=-1)[:, 0]
    valid = (batch_label.reshape(-1) != 0).astype(jnp.float32)
    ref_loss = jnp.sum(valid * (lse - gold)) / B
    ref_seq = (mask * jnp.argmax(logits.reshape(B, S, -1), axis=-1)).astype(jnp.int32)
    assert jnp.allclose(loss, ref_loss, rtol=1e-3, atol=1e-2), (loss, ref_loss)
    assert jnp.array_equal(seq, ref_seq), (seq, ref_seq)

    print("KERNEL_OK")
</pallas_src>

<mosaic_0001>
module attributes {stable_mosaic.version = 11 : i64} {
  func.func @_seqmodel_kernel(%arg0: i32, %arg1: memref<128x32xbf16, #tpu.memory_space<vmem>>, %arg2: memref<32x32xbf16, #tpu.memory_space<vmem>>, %arg3: memref<32x1xf32, #tpu.memory_space<vmem>>, %arg4: memref<16x32xf32, #tpu.memory_space<vmem>>, %arg5: memref<16x1xf32, #tpu.memory_space<vmem>>, %arg6: memref<1x128xi32, #tpu.memory_space<vmem>>, %arg7: memref<1x128xi32, #tpu.memory_space<vmem>>, %arg8: memref<1x128xf32, #tpu.memory_space<vmem>>, %arg9: memref<1x128xi32, #tpu.memory_space<vmem>>) attributes {dimension_semantics = [#tpu.dimension_semantics<parallel>], iteration_bounds = array<i64: 1>, scalar_prefetch = 0 : i64, scratch_operands = 0 : i64, tpu.core_type = #tpu.core_type<tc>, window_params = [{transform_indices = @transform_0, window_bounds = array<i64: 128, 32>}, {pipeline_mode = #tpu.pipeline_mode<synchronous>, transform_indices = @transform_1, window_bounds = array<i64: 32, 32>}, {pipeline_mode = #tpu.pipeline_mode<synchronous>, transform_indices = @transform_2, window_bounds = array<i64: 32, 1>}, {pipeline_mode = #tpu.pipeline_mode<synchronous>, transform_indices = @transform_3, window_bounds = array<i64: 16, 32>}, {pipeline_mode = #tpu.pipeline_mode<synchronous>, transform_indices = @transform_4, window_bounds = array<i64: 16, 1>}, {transform_indices = @transform_5, window_bounds = array<i64: 1, 128>}, {transform_indices = @transform_6, window_bounds = array<i64: 1, 128>}, {transform_indices = @transform_7, window_bounds = array<i64: 1, 128>}, {transform_indices = @transform_8, window_bounds = array<i64: 1, 128>}]} {
    %c0 = arith.constant 0 : index
    %c0_0 = arith.constant 0 : index
    %0 = vector.load %arg2[%c0, %c0_0] : memref<32x32xbf16, #tpu.memory_space<vmem>>, vector<32x32xbf16>
    %c0_1 = arith.constant 0 : index
    %c0_2 = arith.constant 0 : index
    %1 = vector.load %arg1[%c0_1, %c0_2] : memref<128x32xbf16, #tpu.memory_space<vmem>>, vector<128x32xbf16>
    %cst = arith.constant dense<0.000000e+00> : vector<32x128xf32>
    %2 = tpu.matmul %0, %1, %cst {dimension_numbers = #tpu.dot_dimension_numbers<[1], [1], [0], [0], [0, 0, 1, 0], [], []>} : vector<32x32xbf16>, vector<128x32xbf16>, vector<32x128xf32> -> vector<32x128xf32>
    %c0_3 = arith.constant 0 : index
    %c0_4 = arith.constant 0 : index
    %3 = vector.load %arg3[%c0_3, %c0_4] : memref<32x1xf32, #tpu.memory_space<vmem>>, vector<32x1xf32>
    %4 = vector.broadcast %3 : vector<32x1xf32> to vector<32x128xf32>
    %5 = arith.addf %2, %4 : vector<32x128xf32>
    %6 = math.tanh %5 : vector<32x128xf32>
    %c0_5 = arith.constant 0 : index
    %c0_6 = arith.constant 0 : index
    %7 = vector.load %arg4[%c0_5, %c0_6] : memref<16x32xf32, #tpu.memory_space<vmem>>, vector<16x32xf32>
    %cst_7 = arith.constant dense<0.000000e+00> : vector<16x128xf32>
    %8 = tpu.matmul %7, %6, %cst_7 {dimension_numbers = #tpu.dot_dimension_numbers<[1], [0], [0], [1], [0, 0, 1, 1], [], []>} : vector<16x32xf32>, vector<32x128xf32>, vector<16x128xf32> -> vector<16x128xf32>
    %c0_8 = arith.constant 0 : index
    %c0_9 = arith.constant 0 : index
    %9 = vector.load %arg5[%c0_8, %c0_9] : memref<16x1xf32, #tpu.memory_space<vmem>>, vector<16x1xf32>
    %10 = vector.broadcast %9 : vector<16x1xf32> to vector<16x128xf32>
    %11 = arith.addf %8, %10 : vector<16x128xf32>
    %12 = tpu.iota {dimensions = array<i32: 0>} : vector<16x128xi32>
    %c0_10 = arith.constant 0 : index
    %c0_11 = arith.constant 0 : index
    %13 = vector.load %arg6[%c0_10, %c0_11] : memref<1x128xi32, #tpu.memory_space<vmem>>, vector<1x128xi32>
    %c0_12 = arith.constant 0 : index
    %c0_13 = arith.constant 0 : index
    %14 = vector.load %arg7[%c0_12, %c0_13] : memref<1x128xi32, #tpu.memory_space<vmem>>, vector<1x128xi32>
    %cst_14 = arith.constant dense<0xFF800000> : vector<128xf32>
    %15 = vector.multi_reduction <maximumf>, %11, %cst_14 [0] : vector<16x128xf32> to vector<128xf32>
    %16 = vector.shape_cast %15 : vector<128xf32> to vector<1x128xf32>
    %17 = vector.broadcast %16 : vector<1x128xf32> to vector<16x128xf32>
    %18 = arith.subf %11, %17 : vector<16x128xf32>
    %19 = math.exp %18 : vector<16x128xf32>
    %cst_15 = arith.constant dense<0.000000e+00> : vector<128xf32>
    %20 = vector.multi_reduction <add>, %19, %cst_15 [0] : vector<16x128xf32> to vector<128xf32>
    %21 = vector.shape_cast %20 : vector<128xf32> to vector<1x128xf32>
    %22 = math.log %21 : vector<1x128xf32>
    %23 = arith.addf %16, %22 : vector<1x128xf32>
    %24 = vector.broadcast %13 : vector<1x128xi32> to vector<16x128xi32>
    %25 = arith.cmpi eq, %12, %24 : vector<16x128xi32>
    %cst_16 = arith.constant 0.000000e+00 : f32
    %26 = vector.broadcast %cst_16 : f32 to vector<16x128xf32>
    %27 = arith.select %25, %11, %26 : vector<16x128xi1>, vector<16x128xf32>
    %cst_17 = arith.constant dense<0.000000e+00> : vector<128xf32>
    %28 = vector.multi_reduction <add>, %27, %cst_17 [0] : vector<16x128xf32> to vector<128xf32>
    %29 = vector.shape_cast %28 : vector<128xf32> to vector<1x128xf32>
    %c0_i32 = arith.constant 0 : i32
    %30 = vector.broadcast %c0_i32 : i32 to vector<1x128xi32>
    %31 = arith.cmpi ne, %13, %30 : vector<1x128xi32>
    %32 = arith.extui %31 : vector<1x128xi1> to vector<1x128xi32>
    %33 = arith.sitofp %32 : vector<1x128xi32> to vector<1x128xf32>
    %34 = arith.subf %23, %29 : vector<1x128xf32>
    %35 = arith.mulf %33, %34 : vector<1x128xf32>
    %c0_18 = arith.constant 0 : index
    %c0_19 = arith.constant 0 : index
    %36 = vector.load %arg8[%c0_18, %c0_19] : memref<1x128xf32, #tpu.memory_space<vmem>>, vector<1x128xf32>
    tpu.vector_store %arg8[%c0_18, %c0_19], %35 {strides = array<i32>} : memref<1x128xf32, #tpu.memory_space<vmem>>, vector<1x128xf32>,
    %37 = vector.broadcast %16 : vector<1x128xf32> to vector<16x128xf32>
    %38 = arith.cmpf oeq, %11, %37 : vector<16x128xf32>
    %39 = arith.sitofp %12 : vector<16x128xi32> to vector<16x128xf32>
    %cst_20 = arith.constant 1.600000e+01 : f32
    %40 = vector.broadcast %cst_20 : f32 to vector<16x128xf32>
    %41 = arith.select %38, %39, %40 : vector<16x128xi1>, vector<16x128xf32>
    %cst_21 = arith.constant dense<0x7F800000> : vector<128xf32>
    %42 = vector.multi_reduction <minimumf>, %41, %cst_21 [0] : vector<16x128xf32> to vector<128xf32>
    %43 = vector.shape_cast %42 : vector<128xf32> to vector<1x128xf32>
    %44 = arith.fptosi %43 : vector<1x128xf32> to vector<1x128xi32>
    %45 = arith.muli %14, %44 : vector<1x128xi32>
    %c0_22 = arith.constant 0 : index
    %c0_23 = arith.constant 0 : index
    %46 = vector.load %arg9[%c0_22, %c0_23] : memref<1x128xi32, #tpu.memory_space<vmem>>, vector<1x128xi32>
    tpu.vector_store %arg9[%c0_22, %c0_23], %45 {strides = array<i32>} : memref<1x128xi32, #tpu.memory_space<vmem>>, vector<1x128xi32>,
    return
  }
  func.func @transform_0(%arg0: i32) -> (i32, i32) {
    %c0_i32 = arith.constant 0 : i32
    %c0_i32_0 = arith.constant 0 : i32
    return %arg0, %c0_i32 : i32, i32
  }
  func.func @transform_1(%arg0: i32) -> (i32, i32) {
    %c0_i32 = arith.constant 0 : i32
    %c0_i32_0 = arith.constant 0 : i32
    %c0_i32_1 = arith.constant 0 : i32
    return %c0_i32, %c0_i32_0 : i32, i32
  }
  func.func @transform_2(%arg0: i32) -> (i32, i32) {
    %c0_i32 = arith.constant 0 : i32
    %c0_i32_0 = arith.constant 0 : i32
    %c0_i32_1 = arith.constant 0 : i32
    return %c0_i32, %c0_i32_0 : i32, i32
  }
  func.func @transform_3(%arg0: i32) -> (i32, i32) {
    %c0_i32 = arith.constant 0 : i32
    %c0_i32_0 = arith.constant 0 : i32
    %c0_i32_1 = arith.constant 0 : i32
    return %c0_i32, %c0_i32_0 : i32, i32
  }
  func.func @transform_4(%arg0: i32) -> (i32, i32) {
    %c0_i32 = arith.constant 0 : i32
    %c0_i32_0 = arith.constant 0 : i32
    %c0_i32_1 = arith.constant 0 : i32
    return %c0_i32, %c0_i32_0 : i32, i32
  }
  func.func @transform_5(%arg0: i32) -> (i32, i32) {
    %c0_i32 = arith.constant 0 : i32
    %c0_i32_0 = arith.constant 0 : i32
    return %c0_i32, %arg0 : i32, i32
  }
  func.func @transform_6(%arg0: i32) -> (i32, i32) {
    %c0_i32 = arith.constant 0 : i32
    %c0_i32_0 = arith.constant 0 : i32
    return %c0_i32, %arg0 : i32, i32
  }
  func.func @transform_7(%arg0: i32) -> (i32, i32) {
    %c0_i32 = arith.constant 0 : i32
    %c0_i32_0 = arith.constant 0 : i32
    return %c0_i32, %arg0 : i32, i32
  }
  func.func @transform_8(%arg0: i32) -> (i32, i32) {
    %c0_i32 = arith.constant 0 : i32
    %c0_i32_0 = arith.constant 0 : i32
    return %c0_i32, %arg0 : i32, i32
  }
}

</mosaic_0001>

<llo_original>
// kernel: tpu_custom_call.1
$region0: #{tpu_custom_call.1}
  #allocation0 [shape = 'u32[]', space=smem, size = 0x4, offset = 0x4, fixed_abs, tag = 'smem constant byte address 0x4 - core index']
  #allocation1 [shape = 'u32[144,128]{1,0:T(1,128)}', space=vmem, size = 0x12000, scoped, tag = 'internal scratch']
  %s0 = inlined_call_operand.vmem [shape: bf16[128,32], index: 0, kind: input, shape index: {}]
  %s1 = inlined_call_operand.vmem [shape: bf16[32,32], index: 1, kind: input, shape index: {}]
  %s2 = inlined_call_operand.vmem [shape: f32[32,1], index: 2, kind: input, shape index: {}]
  %s3 = inlined_call_operand.vmem [shape: f32[16,32], index: 3, kind: input, shape index: {}]
  %s4 = inlined_call_operand.vmem [shape: f32[16,1], index: 4, kind: input, shape index: {}]
  %s5 = inlined_call_operand.vmem [shape: s32[1,128], index: 5, kind: input, shape index: {}]
  %s6 = inlined_call_operand.vmem [shape: s32[1,128], index: 6, kind: input, shape index: {}]
  %s7 = inlined_call_operand.hbm [shape: f32[1,128], index: 7, kind: output, shape index: {0}]
  %s8 = inlined_call_operand.hbm [shape: s32[1,128], index: 8, kind: output, shape index: {1}]
  %9 = xla_tuple %s7, %s8
  %s10 = sld [smem:[#allocation0]]
  $region46: #{tpu_custom_call.1} parent=0
    _
  %s12 = ssub.s32 1, %s10
  %s13 = scalar_select 0, %s12, %s10
  $region1: #{tpu_custom_call.1} parent=0
    #allocation2 [shape = 'u8[512]{0}', space=vmem, size = 0x400, scoped, tag = 'output window, operand 0, single buffered']
    #allocation3 [shape = 's32[1]{0}', space=sflag, size = 0x4, scoped, tag = 'scoped memory for tpu_custom_call.1']
    #allocation4 [shape = 'u8[512]{0}', space=vmem, size = 0x400, scoped, tag = 'output window, operand 1, single buffered']
    #allocation5 [shape = 's32[1]{0}', space=sflag, size = 0x4, scoped, tag = 'scoped memory for tpu_custom_call.1']
    %14 = vsyncpa [#allocation3], 0
    %15 = vsyncpa [#allocation5], 0
    // Predicated region
    $region2: #{tpu_custom_call.1} parent=1 // pred_check
      _
    $region3: #{tpu_custom_call.1} parent=1 // pred_check_branch
      %17 = sbr.rel (0) target = $region5
    $region4: #{tpu_custom_call.1} parent=1 // pred_region
      _
    $region5: #{tpu_custom_call.1} parent=1 // pred_fallthru
      _
    // Predicated region
    $region6: #{tpu_custom_call.1} parent=1 // pred_check
      _
    $region7: #{tpu_custom_call.1} parent=1 // pred_check_branch
      %19 = sbr.rel (0) target = $region9
    $region8: #{tpu_custom_call.1} parent=1 // pred_region
      _
    $region9: #{tpu_custom_call.1} parent=1 // pred_fallthru
      _
    // Predicated region
    $region10: #{tpu_custom_call.1} parent=1 // pred_check
      _
    $region11: #{tpu_custom_call.1} parent=1 // pred_check_branch
      %21 = sbr.rel (0) target = $region13
    $region12: #{tpu_custom_call.1} parent=1 // pred_region
      _
    $region13: #{tpu_custom_call.1} parent=1 // pred_fallthru
      _
    // Predicated region
    $region14: #{tpu_custom_call.1} parent=1 // pred_check
      _
    $region15: #{tpu_custom_call.1} parent=1 // pred_check_branch
      %23 = sbr.rel (0) target = $region17
    $region16: #{tpu_custom_call.1} parent=1 // pred_region
      _
    $region17: #{tpu_custom_call.1} parent=1 // pred_fallthru
      _
    // Predicated region
    $region18: #{tpu_custom_call.1} parent=1 // pred_check
      _
    $region19: #{tpu_custom_call.1} parent=1 // pred_check_branch
      %25 = sbr.rel (0) target = $region21
    $region20: #{tpu_custom_call.1} parent=1 // pred_region
      _
    $region21: #{tpu_custom_call.1} parent=1 // pred_fallthru
      _
    // Predicated region
    $region22: #{tpu_custom_call.1} parent=1 // pred_check
      _
    $region23: #{tpu_custom_call.1} parent=1 // pred_check_branch
      %27 = sbr.rel (0) target = $region25
    $region24: #{tpu_custom_call.1} parent=1 // pred_region
      _
    $region25: #{tpu_custom_call.1} parent=1 // pred_fallthru
      _
    // Predicated region
    $region26: #{tpu_custom_call.1} parent=1 // pred_check
      _
    $region27: #{tpu_custom_call.1} parent=1 // pred_check_branch
      %29 = sbr.rel (0) target = $region29
    $region28: #{tpu_custom_call.1} parent=1 // pred_region
      _
    $region29: #{tpu_custom_call.1} parent=1 // pred_fallthru
      _
    %v31 = vld [vmem:[%s1] sm:$0xf]
    %v32 = vld [vmem:[%s1 + $0x4] sm:$0xf]
    %v33 = vld [vmem:[%s1 + $0x8] sm:$0xf]
    %v34 = vld [vmem:[%s1 + $0xc] sm:$0xf]
    %v35 = vld [vmem:[%s0] sm:$0xf]
    %v36 = vld [vmem:[%s0 + $0x4] sm:$0xf]
    %v37 = vld [vmem:[%s0 + $0x8] sm:$0xf]
    %v38 = vld [vmem:[%s0 + $0xc] sm:$0xf]
    %v39 = vld [vmem:[%s0 + $0x10] sm:$0xf]
    %v40 = vld [vmem:[%s0 + $0x14] sm:$0xf]
    %v41 = vld [vmem:[%s0 + $0x18] sm:$0xf]
    %v42 = vld [vmem:[%s0 + $0x1c] sm:$0xf]
    %v43 = vld [vmem:[%s0 + $0x20] sm:$0xf]
    %v44 = vld [vmem:[%s0 + $0x24] sm:$0xf]
    %v45 = vld [vmem:[%s0 + $0x28] sm:$0xf]
    %v46 = vld [vmem:[%s0 + $0x2c] sm:$0xf]
    %v47 = vld [vmem:[%s0 + $0x30] sm:$0xf]
    %v48 = vld [vmem:[%s0 + $0x34] sm:$0xf]
    %v49 = vld [vmem:[%s0 + $0x38] sm:$0xf]
    %v50 = vld [vmem:[%s0 + $0x3c] sm:$0xf]
    %v51 = vld [vmem:[%s2] sm:$0xff]
    %v52 = vld [vmem:[%s2 + $0x8] sm:$0xff]
    %v53 = vld [vmem:[%s2 + $0x10] sm:$0xff]
    %v54 = vld [vmem:[%s2 + $0x18] sm:$0xff]
    %56 = vset.pattern.permute.xlu0 0
    %57 = vperm.xlu0 %56, %v51
    %v58 = vpop.permute.xlu0 %57
    %61 = vset.pattern.permute.xlu0 0
    %62 = vperm.xlu0 %61, %v52
    %v63 = vpop.permute.xlu0 %62
    %66 = vset.pattern.permute.xlu0 0
    %67 = vperm.xlu0 %66, %v53
    %v68 = vpop.permute.xlu0 %67
    %71 = vset.pattern.permute.xlu0 0
    %72 = vperm.xlu0 %71, %v54
    %v73 = vpop.permute.xlu0 %72
    %v79 = vunpack.c.l.b16 %v31
    %v80 = vunpack.c.l.b16 %v32
    %v81 = vunpack.c.l.b16 %v33
    %v82 = vunpack.c.l.b16 %v34
    %v83 = vpack.c.b16 %v80, %v79
    %v84 = vpack.c.b16 %v82, %v81
    %v101 = vunpack.c.l.b16 %v35
    %v102 = vunpack.c.l.b16 %v36
    %v103 = vunpack.c.l.b16 %v37
    %v104 = vunpack.c.l.b16 %v38
    %v105 = vunpack.c.l.b16 %v39
    %v106 = vunpack.c.l.b16 %v40
    %v107 = vunpack.c.l.b16 %v41
    %v108 = vunpack.c.l.b16 %v42
    %v109 = vunpack.c.l.b16 %v43
    %v110 = vunpack.c.l.b16 %v44
    %v111 = vunpack.c.l.b16 %v45
    %v112 = vunpack.c.l.b16 %v46
    %v113 = vunpack.c.l.b16 %v47
    %v114 = vunpack.c.l.b16 %v48
    %v115 = vunpack.c.l.b16 %v49
    %v116 = vunpack.c.l.b16 %v50
    %v117 = vpack.c.b16 %v102, %v101
    %v118 = vpack.c.b16 %v104, %v103
    %v119 = vpack.c.b16 %v106, %v105
    %v120 = vpack.c.b16 %v108, %v107
    %v121 = vpack.c.b16 %v110, %v109
    %v122 = vpack.c.b16 %v112, %v111
    %v123 = vpack.c.b16 %v114, %v113
    %v124 = vpack.c.b16 %v116, %v115
    %vm125 = vcmask 261120
    %v127 = vsel %vm125, %v83, 0
    %v130 = vsel %vm125, %v84, 0
    %v133 = vsel %vm125, %v117, 0
    %v136 = vsel %vm125, %v118, 0
    %v139 = vsel %vm125, %v119, 0
    %v142 = vsel %vm125, %v120, 0
    %v145 = vsel %vm125, %v121, 0
    %v148 = vsel %vm125, %v122, 0
    %v151 = vsel %vm125, %v123, 0
    %v154 = vsel %vm125, %v124, 0
    %156 = vmatprep.subr.bf16.mxu0 0
    %157 = vmatpush1.bf16.xpose.msra.mxu0 %v133
    %158 = vmatprep.subr.bf16.mxu0 0
    %159 = vmatpush1.bf16.xpose.msra.mxu0 %v136
    %160 = vmatprep.subr.bf16.mxu0 0
    %161 = vmatpush1.bf16.xpose.msra.mxu0 %v139
    %162 = vmatprep.subr.bf16.mxu0 0
    %163 = vmatpush1.bf16.xpose.msra.mxu0 %v142
    %164 = vmatprep.subr.bf16.mxu0 0
    %165 = vmatpush1.bf16.xpose.msra.mxu0 %v145
    %166 = vmatprep.subr.bf16.mxu0 0
    %167 = vmatpush1.bf16.xpose.msra.mxu0 %v148
    %168 = vmatprep.subr.bf16.mxu0 0
    %169 = vmatpush1.bf16.xpose.msra.mxu0 %v151
    %170 = vmatprep.subr.bf16.mxu0 0
    %171 = vmatpush1.bf16.xpose.msra.mxu0 %v154
    %172 = vmatprep.subr.bf16.mxu0 0
    %173 = vmatpush1.bf16.xpose.msra.mxu0 0
    %174 = vmatprep.subr.bf16.mxu0 0
    %175 = vmatpush1.bf16.xpose.msra.mxu0 0
    %176 = vmatprep.subr.bf16.mxu0 0
    %177 = vmatpush1.bf16.xpose.msra.mxu0 0
    %178 = vmatprep.subr.bf16.mxu0 0
    %179 = vmatpush1.bf16.xpose.msra.mxu0 0
    %180 = vmatprep.subr.bf16.mxu0 0
    %181 = vmatpush1.bf16.xpose.msra.mxu0 0
    %182 = vmatprep.subr.bf16.mxu0 0
    %183 = vmatpush1.bf16.xpose.msra.mxu0 0
    %184 = vmatprep.subr.bf16.mxu0 0
    %185 = vmatpush1.bf16.xpose.msra.mxu0 0
    %186 = vmatprep.subr.bf16.mxu0 0
    %187 = vmatpush1.bf16.xpose.msra.mxu0 0
    %188 = vmatprep.mubr.bf16.mxu0 0
    %189 = vmatmul.mubr.bf16.gmra.mrb[0].mxu0 %v127
    %v190 = vpop.f32.mrb[0].mxu0
    %v191 = vadd.f32 %v58, %v190
    %v192 = vpop.f32.mrb[0].mxu0
    %v193 = vpop.f32.mrb[0].mxu0
    %v194 = vadd.f32 %v63, %v193
    %v195 = vpop.f32.mrb[0].mxu0
    %196 = vmatprep.mubr.bf16.mxu0 0
    %197 = vmatmul.mubr.bf16.gmra.mrb[0].mxu0 %v130
    %v198 = vpop.f32.mrb[0].mxu0
    %v199 = vadd.f32 %v68, %v198
    %v200 = vpop.f32.mrb[0].mxu0
    %v201 = vpop.f32.mrb[0].mxu0
    %v202 = vadd.f32 %v73, %v201
    %v203 = vpop.f32.mrb[0].mxu0
    %204 = vdwg.mxu0
    %v205 = vtanh.pop %v191
    %v206 = vtanh.pop %v194
    %v207 = vtanh.pop %v199
    %v208 = vtanh.pop %v202
    %v209 = vld [vmem:[%s3] sm:$0xff]
    %v210 = vld [vmem:[%s3 + $0x8] sm:$0xff]
    %v211 = vld [vmem:[%s4] sm:$0xff]
    %v212 = vld [vmem:[%s4 + $0x8] sm:$0xff]
    %214 = vset.pattern.permute.xlu0 0
    %215 = vperm.xlu0 %214, %v211
    %v216 = vpop.permute.xlu0 %215
    %219 = vset.pattern.permute.xlu0 0
    %220 = vperm.xlu0 %219, %v212
    %v221 = vpop.permute.xlu0 %220
    %v224 = vsel %vm125, %v209, 0
    %v227 = vsel %vm125, %v210, 0
    %229 = vmatprep.subr.mxu0 0.0
    %230 = vmatpush1.msra.mxu0 %v205
    %231 = vmatprep.subr.mxu0 0.0
    %232 = vmatpush1.msra.mxu0 %v206
    %233 = vmatprep.subr.mxu0 0.0
    %234 = vmatpush1.msra.mxu0 %v207
    %235 = vmatprep.subr.mxu0 0.0
    %236 = vmatpush1.msra.mxu0 %v208
    %237 = vmatprep.subr.mxu0 0.0
    %238 = vmatpush1.msra.mxu0 0.0
    %239 = vmatprep.subr.mxu0 0.0
    %240 = vmatpush1.msra.mxu0 0.0
    %241 = vmatprep.subr.mxu0 0.0
    %242 = vmatpush1.msra.mxu0 0.0
    %243 = vmatprep.subr.mxu0 0.0
    %244 = vmatpush1.msra.mxu0 0.0
    %245 = vmatprep.subr.mxu0 0.0
    %246 = vmatpush1.msra.mxu0 0.0
    %247 = vmatprep.subr.mxu0 0.0
    %248 = vmatpush1.msra.mxu0 0.0
    %249 = vmatprep.subr.mxu0 0.0
    %250 = vmatpush1.msra.mxu0 0.0
    %251 = vmatprep.subr.mxu0 0.0
    %252 = vmatpush1.msra.mxu0 0.0
    %253 = vmatprep.subr.mxu0 0.0
    %254 = vmatpush1.msra.mxu0 0.0
    %255 = vmatprep.subr.mxu0 0.0
    %256 = vmatpush1.msra.mxu0 0.0
    %257 = vmatprep.subr.mxu0 0.0
    %258 = vmatpush1.msra.mxu0 0.0
    %259 = vmatprep.subr.mxu0 0.0
    %260 = vmatpush1.msra.mxu0 0.0
    %261 = vmatprep.subr.mxu0 0.0
    %262 = vmatpush1.msra.mxu0 0.0
    %263 = vmatprep.subr.mxu0 0.0
    %264 = vmatpush1.msra.mxu0 0.0
    %265 = vmatprep.subr.mxu0 0.0
    %266 = vmatpush1.msra.mxu0 0.0
    %267 = vmatprep.subr.mxu0 0.0
    %268 = vmatpush1.msra.mxu0 0.0
    %269 = vmatprep.subr.mxu0 0.0
    %270 = vmatpush1.msra.mxu0 0.0
    %271 = vmatprep.subr.mxu0 0.0
    %272 = vmatpush1.msra.mxu0 0.0
    %273 = vmatprep.subr.mxu0 0.0
    %274 = vmatpush1.msra.mxu0 0.0
    %275 = vmatprep.subr.mxu0 0.0
    %276 = vmatpush1.msra.mxu0 0.0
    %277 = vmatprep.subr.mxu0 0.0
    %278 = vmatpush1.msra.mxu0 0.0
    %279 = vmatprep.subr.mxu0 0.0
    %280 = vmatpush1.msra.mxu0 0.0
    %281 = vmatprep.subr.mxu0 0.0
    %282 = vmatpush1.msra.mxu0 0.0
    %283 = vmatprep.subr.mxu0 0.0
    %284 = vmatpush1.msra.mxu0 0.0
    %285 = vmatprep.subr.mxu0 0.0
    %286 = vmatpush1.msra.mxu0 0.0
    %287 = vmatprep.subr.mxu0 0.0
    %288 = vmatpush1.msra.mxu0 0.0
    %289 = vmatprep.subr.mxu0 0.0
    %290 = vmatpush1.msra.mxu0 0.0
    %291 = vmatprep.subr.mxu0 0.0
    %292 = vmatpush1.msra.mxu0 0.0
    %293 = vmatprep.mubr.f32.mxu0 0.0
    %294 = vmatmul.mubr.f32.gmra.mrb[0].mxu0 %v224
    %v295 = vpop.f32.mrb[0].mxu0
    %v296 = vadd.f32 %v216, %v295
    %v297 = vpop.f32.mrb[0].mxu0
    %298 = vmatprep.mubr.f32.mxu0 0.0
    %299 = vmatmul.mubr.f32.gmra.mrb[0].mxu0 %v227
    %v300 = vpop.f32.mrb[0].mxu0
    %v301 = vadd.f32 %v221, %v300
    %v302 = vpop.f32.mrb[0].mxu0
    %303 = vdwg.mxu0
    %v304 = vlaneseq
    %v305 = vshrl.u32 %v304, 7
    %v306 = vadd.s32 %v305, 8
    %v307 = vld [vmem:[%s5] sm:$0x1]
    %v308 = vld [vmem:[%s6] sm:$0x1]
    %v309 = vmax.f32 %v296, %v301
    %v310 = vrot.slane %v309, 4
    %v311 = vmax.f32 %v309, %v310
    %v312 = vrot.slane %v311, 2
    %v313 = vmax.f32 %v311, %v312
    %v314 = vrot.slane %v313, 1
    %v315 = vmax.f32 %v313, %v314
    %v316 = vsub.f32 %v296, %v315
    %v317 = vsub.f32 %v301, %v315
    %v318 = vmul.f32 %v316, 1.442695
    %v319 = vpow.pop %v318
    %v320 = vmul.f32 %v317, 1.442695
    %v321 = vpow.pop %v320
    %v322 = vadd.f32 %v319, %v321
    %v323 = vrot.slane %v322, 4
    %v324 = vadd.f32 %v322, %v323
    %v325 = vrot.slane %v324, 2
    %v326 = vadd.f32 %v324, %v325
    %v327 = vrot.slane %v326, 1
    %v328 = vadd.f32 %v326, %v327
    %v329 = vlog2.pop %v328
    %v330 = vmul.f32 %v329, 0.6931472
    %v331 = vadd.f32 %v315, %v330
    %v332 = vlaneseq
    %v333 = vshrl.u32 %v332, 7
    %v334 = vsub.s32 0, %v333
    %v335 = vrot.slane %v307, %v334
    %vm336 = vcmp.eq.s32.totalorder %v305, %v335
    %vm337 = vcmp.eq.s32.totalorder %v306, %v335
    %v338 = vsel %vm336, %v296, 0.0
    %v339 = vsel %vm337, %v301, 0.0
    %v340 = vadd.f32 %v338, %v339
    %v341 = vrot.slane %v340, 4
    %v342 = vadd.f32 %v340, %v341
    %v343 = vrot.slane %v342, 2
    %v344 = vadd.f32 %v342, %v343
    %v345 = vrot.slane %v344, 1
    %v346 = vadd.f32 %v344, %v345
    %vm347 = vcmp.ne.s32.totalorder %v307, 0
    %v348 = vsel %vm347, 1, 0
    %v349 = vcvt.s32.f32 %v348
    %v350 = vsub.f32 %v331, %v346
    %v351 = vmul.f32 %v349, %v350
    %352 = vst [vmem:[#allocation2] sm:$0x1] %v351
    %vm353 = vcmp.eq.f32.partialorder %v296, %v315
    %vm354 = vcmp.eq.f32.partialorder %v301, %v315
    %v355 = vcvt.s32.f32 %v305
    %v356 = vcvt.s32.f32 %v306
    %v357 = vsel %vm353, %v355, 16.0
    %v358 = vsel %vm354, %v356, 16.0
    %v359 = vmin.f32 %v357, %v358
    %v360 = vrot.slane %v359, 4
    %v361 = vmin.f32 %v359, %v360
    %v362 = vrot.slane %v361, 2
    %v363 = vmin.f32 %v361, %v362
    %v364 = vrot.slane %v363, 1
    %v365 = vmin.f32 %v363, %v364
    %v366 = vcvt.f32.s32.to.zero.pseudo %v365
    %v367 = vmul.u32 %v308, %v366
    %368 = vst [vmem:[#allocation4] sm:$0x1] %v367
    // Predicated region
    $region30: #{tpu_custom_call.1} parent=1 // pred_check
      _
    $region31: #{tpu_custom_call.1} parent=1 // pred_check_branch
      %370 = sbr.rel (0) target = $region33
    $region32: #{tpu_custom_call.1} parent=1 // pred_region
      %s372 = ssub.s32 16, 16
      %373 = vsyncadd [#allocation3], %s372
      %s375 = sshll.u32 [#allocation2], 4
      %s376 = int_to_ptr.vmem [resolvable:$true] %s375
      %378 = dma.vmem_to_hbm [thread:$0]  %s376, 16, %s7, [#allocation3]
    $region33: #{tpu_custom_call.1} parent=1 // pred_fallthru
      _
    // Predicated region
    $region34: #{tpu_custom_call.1} parent=1 // pred_check
      _
    $region35: #{tpu_custom_call.1} parent=1 // pred_check_branch
      %380 = sbr.rel (0) target = $region37
    $region36: #{tpu_custom_call.1} parent=1 // pred_region
      %s382 = ssub.s32 16, 16
      %383 = vsyncadd [#allocation5], %s382
      %s385 = sshll.u32 [#allocation4], 4
      %s386 = int_to_ptr.vmem [resolvable:$true] %s385
      %388 = dma.vmem_to_hbm [thread:$0]  %s386, 16, %s8, [#allocation5]
    $region37: #{tpu_custom_call.1} parent=1 // pred_fallthru
      _
    // Predicated region
    $region38: #{tpu_custom_call.1} parent=1 // pred_check
      _
    $region39: #{tpu_custom_call.1} parent=1 // pred_check_branch
      %390 = sbr.rel (0) target = $region41
    $region40: #{tpu_custom_call.1} parent=1 // pred_region
      %391 = dma.done [#allocation3], 16
    $region41: #{tpu_custom_call.1} parent=1 // pred_fallthru
      _
    // Predicated region
    $region42: #{tpu_custom_call.1} parent=1 // pred_check
      _
    $region43: #{tpu_custom_call.1} parent=1 // pred_check_branch
      %393 = sbr.rel (0) target = $region45
    $region44: #{tpu_custom_call.1} parent=1 // pred_region
      %394 = dma.done [#allocation5], 16
    $region45: #{tpu_custom_call.1} parent=1 // pred_fallthru
      _
    %395 = vsyncpa [#allocation3], 1
    %396 = vsyncpa [#allocation5], 1

</llo_original>
